<compile_context>
chip_gen: v5e
topology: v5e:2x2
jax: 0.10.0
libtpu: 0.0.40
codegen_flags: <defaults>
</compile_context>

<pallas_src>
import jax
import jax.numpy as jnp
from jax.experimental import pallas as pl
from jax.experimental.pallas import tpu as pltpu


def _round_up(n: int, m: int) -> int:
    return (n + m - 1) // m * m


_SUBLANE = 16  # covers bf16 sublane packing (and f32's 8)


def tfc_head_kernel(x_ref, w1_ref, b1_ref, w2_ref, b2_ref, o_ref):
    # Cast activations to the MXU dtype in-kernel (free VPU op, no extra HBM pass).
    x = x_ref[...].astype(w1_ref.dtype)
    # Hidden layer on the MXU: (TB, D) @ (D, Hp) with f32 accumulation.
    h = jnp.dot(x, w1_ref[...], preferred_element_type=jnp.float32)
    # Bias add + sigmoid in f32 (safe on v5e which lacks bf16 VPU/EUP).
    h = jax.nn.sigmoid(h + b1_ref[...])
    # Output layer on the MXU: (TB, Hp) @ (Hp, C) with f32 accumulation.
    out = jnp.dot(h.astype(w2_ref.dtype), w2_ref[...],
                  preferred_element_type=jnp.float32)
    # Narrow, unpadded store (last dim = num_classes) in the output dtype.
    o_ref[...] = (out + b2_ref[...]).astype(o_ref.dtype)


def prepare_params(w1, b1, w2, b2, *, compute_dtype=jnp.bfloat16):
    """Pad+cast parameters ONCE (hoisted out of the per-forward path).

    w1: (D, H), b1: (H,) or (1, H), w2: (H, C), b2: (C,) or (1, C)

    The hidden dim is padded H -> Hp (multiple of 128) so the intermediate and
    both MXU contractions are lane-dense. Padding is exact: the padded rows of
    w2 are zero, so the sigmoid(b1_pad)=sigmoid(0)=0.5 values on padded hidden
    units multiply zero weights and contribute nothing.
    """
    D, H = w1.shape
    C = w2.shape[1]
    Hp = _round_up(H, 128)
    w1p = jnp.pad(w1, ((0, 0), (0, Hp - H))).astype(compute_dtype)
    b1p = jnp.pad(b1.reshape(1, -1), ((0, 0), (0, Hp - H))).astype(jnp.float32)
    w2p = jnp.pad(w2, ((0, Hp - H), (0, 0))).astype(compute_dtype)
    b2p = b2.reshape(1, -1).astype(jnp.float32)
    return w1p, b1p, w2p, b2p


def _choose_batch_tiling(B: int, block_cap: int):
    """Pick (TB, n_tiles, Bp) so padding waste is small and, for anything
    beyond a couple of sublane rows, the grid has >= 2 steps (v7x 2-TC split)."""
    if B <= 2 * _SUBLANE:
        return B, 1, B                        # one tile, block == full dim, no pad
    n_tiles = max(pl.cdiv(B, block_cap), 2)   # >= 2 so both v7x TensorCores work
    TB = _round_up(pl.cdiv(B, n_tiles), _SUBLANE)
    n_tiles = pl.cdiv(B, TB)
    return TB, n_tiles, TB * n_tiles


def tfc_head(x, params, *, block_cap=4096):
    """TFCHead forward.

    x:      (B, D) activations (any float dtype; cast to MXU dtype in-kernel)
    params: output of prepare_params()
    """
    w1p, b1p, w2p, b2p = params
    B, D = x.shape
    Hp = w1p.shape[1]
    C = w2p.shape[1]
    out_dtype = x.dtype

    TB, n_tiles, Bp = _choose_batch_tiling(B, block_cap)
    xp = x if Bp == B else jnp.pad(x, ((0, Bp - B), (0, 0)))

    out = pl.pallas_call(
        tfc_head_kernel,
        out_shape=jax.ShapeDtypeStruct((Bp, C), out_dtype),
        grid=(n_tiles,),
        in_specs=[
            pl.BlockSpec((TB, D), lambda i: (i, 0)),    # activations: tiled
            pl.BlockSpec((D, Hp), lambda i: (0, 0)),    # weights: VMEM-resident
            pl.BlockSpec((1, Hp), lambda i: (0, 0)),
            pl.BlockSpec((Hp, C), lambda i: (0, 0)),
            pl.BlockSpec((1, C), lambda i: (0, 0)),
        ],
        out_specs=pl.BlockSpec((TB, C), lambda i: (i, 0)),
        compiler_params=pltpu.CompilerParams(
            dimension_semantics=("parallel",),          # megacore split on v7x
            vmem_limit_bytes=32 * 1024 * 1024,          # v7x-safe, > v5e default
        ),
    )(xp, w1p, b1p, w2p, b2p)

    # Padded batch rows are garbage (sigmoid(b1)·w2 + b2); always slice them off.
    return out if Bp == B else out[:B]


def init_params(key, input_size, hidden, num_classes, dtype=jnp.float32):
    """Deterministic synthetic init (uniform, like torch's default range)."""
    k1, k2, k3, k4 = jax.random.split(key, 4)
    bound1 = 1.0 / (input_size ** 0.5)
    bound2 = 1.0 / (hidden ** 0.5)
    w1 = jax.random.uniform(k1, (input_size, hidden), dtype, -bound1, bound1)
    b1 = jax.random.uniform(k2, (1, hidden), dtype, -bound1, bound1)
    w2 = jax.random.uniform(k3, (hidden, num_classes), dtype, -bound2, bound2)
    b2 = jax.random.uniform(k4, (1, num_classes), dtype, -bound2, bound2)
    return w1, b1, w2, b2


def reference(x, w1, b1, w2, b2):
    h = jax.nn.sigmoid(x @ w1 + b1)
    return h @ w2 + b2


if __name__ == "__main__":
    # Small shapes consistent with the module defaults: TFCHead(input_size=256).
    batch = 8
    input_size = 256
    hidden = 64
    num_classes = 2

    key = jax.random.PRNGKey(0)
    kx, kp = jax.random.split(key)
    x = jax.random.normal(kx, (batch, input_size), jnp.float32)
    w1, b1, w2, b2 = init_params(kp, input_size, hidden, num_classes)

    ref = reference(x, w1, b1, w2, b2)

    # f32 MXU path.
    params_f32 = prepare_params(w1, b1, w2, b2, compute_dtype=jnp.float32)
    out_f32 = jax.block_until_ready(tfc_head(x, params_f32))
    assert out_f32.shape == (batch, num_classes)
    assert jnp.allclose(out_f32, ref, atol=1e-4, rtol=1e-4)

    # bf16 MXU path (default perf path): f32 accumulation, looser tolerance.
    params_bf16 = prepare_params(w1, b1, w2, b2, compute_dtype=jnp.bfloat16)
    out_bf16 = jax.block_until_ready(tfc_head(x, params_bf16))
    assert out_bf16.shape == (batch, num_classes)
    assert jnp.allclose(out_bf16, ref, atol=5e-2, rtol=5e-2)

    print("KERNEL_OK")
</pallas_src>

<mosaic_0001>
module attributes {stable_mosaic.version = 11 : i64} {
  func.func @tfc_head_kernel(%arg0: i32, %arg1: memref<8x256xf32, #tpu.memory_space<vmem>>, %arg2: memref<256x128xf32, #tpu.memory_space<vmem>>, %arg3: memref<1x128xf32, #tpu.memory_space<vmem>>, %arg4: memref<128x2xf32, #tpu.memory_space<vmem>>, %arg5: memref<1x2xf32, #tpu.memory_space<vmem>>, %arg6: memref<8x2xf32, #tpu.memory_space<vmem>>) attributes {dimension_semantics = [#tpu.dimension_semantics<parallel>], iteration_bounds = array<i64: 1>, scalar_prefetch = 0 : i64, scratch_operands = 0 : i64, tpu.core_type = #tpu.core_type<tc>, window_params = [{transform_indices = @transform_0, window_bounds = array<i64: 8, 256>}, {pipeline_mode = #tpu.pipeline_mode<synchronous>, transform_indices = @transform_1, window_bounds = array<i64: 256, 128>}, {pipeline_mode = #tpu.pipeline_mode<synchronous>, transform_indices = @transform_2, window_bounds = array<i64: 1, 128>}, {pipeline_mode = #tpu.pipeline_mode<synchronous>, transform_indices = @transform_3, window_bounds = array<i64: 128, 2>}, {pipeline_mode = #tpu.pipeline_mode<synchronous>, transform_indices = @transform_4, window_bounds = array<i64: 1, 2>}, {transform_indices = @transform_5, window_bounds = array<i64: 8, 2>}]} {
    %c0 = arith.constant 0 : index
    %c0_0 = arith.constant 0 : index
    %0 = vector.load %arg1[%c0, %c0_0] : memref<8x256xf32, #tpu.memory_space<vmem>>, vector<8x256xf32>
    %c0_1 = arith.constant 0 : index
    %c0_2 = arith.constant 0 : index
    %1 = vector.load %arg2[%c0_1, %c0_2] : memref<256x128xf32, #tpu.memory_space<vmem>>, vector<256x128xf32>
    %cst = arith.constant dense<0.000000e+00> : vector<8x128xf32>
    %2 = tpu.matmul %0, %1, %cst {dimension_numbers = #tpu.dot_dimension_numbers<[1], [0], [0], [1], [0, 0, 1, 1], [], []>} : vector<8x256xf32>, vector<256x128xf32>, vector<8x128xf32> -> vector<8x128xf32>
    %c0_3 = arith.constant 0 : index
    %c0_4 = arith.constant 0 : index
    %3 = vector.load %arg3[%c0_3, %c0_4] : memref<1x128xf32, #tpu.memory_space<vmem>>, vector<1x128xf32>
    %4 = vector.broadcast %3 : vector<1x128xf32> to vector<8x128xf32>
    %5 = arith.addf %2, %4 : vector<8x128xf32>
    %6 = arith.negf %5 : vector<8x128xf32>
    %7 = math.exp %6 : vector<8x128xf32>
    %cst_5 = arith.constant 1.000000e+00 : f32
    %8 = vector.broadcast %cst_5 : f32 to vector<8x128xf32>
    %9 = arith.addf %8, %7 : vector<8x128xf32>
    %10 = arith.divf %8, %9 : vector<8x128xf32>
    %c0_6 = arith.constant 0 : index
    %c0_7 = arith.constant 0 : index
    %11 = vector.load %arg4[%c0_6, %c0_7] : memref<128x2xf32, #tpu.memory_space<vmem>>, vector<128x2xf32>
    %cst_8 = arith.constant dense<0.000000e+00> : vector<8x2xf32>
    %12 = tpu.matmul %10, %11, %cst_8 {dimension_numbers = #tpu.dot_dimension_numbers<[1], [0], [0], [1], [0, 0, 1, 1], [], []>} : vector<8x128xf32>, vector<128x2xf32>, vector<8x2xf32> -> vector<8x2xf32>
    %c0_9 = arith.constant 0 : index
    %c0_10 = arith.constant 0 : index
    %13 = vector.load %arg5[%c0_9, %c0_10] : memref<1x2xf32, #tpu.memory_space<vmem>>, vector<1x2xf32>
    %14 = vector.broadcast %13 : vector<1x2xf32> to vector<8x2xf32>
    %15 = arith.addf %12, %14 : vector<8x2xf32>
    %c0_11 = arith.constant 0 : index
    %c0_12 = arith.constant 0 : index
    %16 = vector.load %arg6[%c0_11, %c0_12] : memref<8x2xf32, #tpu.memory_space<vmem>>, vector<8x2xf32>
    tpu.vector_store %arg6[%c0_11, %c0_12], %15 {strides = array<i32>} : memref<8x2xf32, #tpu.memory_space<vmem>>, vector<8x2xf32>,
    return
  }
  func.func @transform_0(%arg0: i32) -> (i32, i32) {
    %c0_i32 = arith.constant 0 : i32
    %c0_i32_0 = arith.constant 0 : i32
    return %arg0, %c0_i32 : i32, i32
  }
  func.func @transform_1(%arg0: i32) -> (i32, i32) {
    %c0_i32 = arith.constant 0 : i32
    %c0_i32_0 = arith.constant 0 : i32
    %c0_i32_1 = arith.constant 0 : i32
    return %c0_i32, %c0_i32_0 : i32, i32
  }
  func.func @transform_2(%arg0: i32) -> (i32, i32) {
    %c0_i32 = arith.constant 0 : i32
    %c0_i32_0 = arith.constant 0 : i32
    %c0_i32_1 = arith.constant 0 : i32
    return %c0_i32, %c0_i32_0 : i32, i32
  }
  func.func @transform_3(%arg0: i32) -> (i32, i32) {
    %c0_i32 = arith.constant 0 : i32
    %c0_i32_0 = arith.constant 0 : i32
    %c0_i32_1 = arith.constant 0 : i32
    return %c0_i32, %c0_i32_0 : i32, i32
  }
  func.func @transform_4(%arg0: i32) -> (i32, i32) {
    %c0_i32 = arith.constant 0 : i32
    %c0_i32_0 = arith.constant 0 : i32
    %c0_i32_1 = arith.constant 0 : i32
    return %c0_i32, %c0_i32_0 : i32, i32
  }
  func.func @transform_5(%arg0: i32) -> (i32, i32) {
    %c0_i32 = arith.constant 0 : i32
    %c0_i32_0 = arith.constant 0 : i32
    return %arg0, %c0_i32 : i32, i32
  }
}

</mosaic_0001>

<llo_original>
// kernel: tpu_custom_call.1
$region0: #{tpu_custom_call.1}
  #allocation0 [shape = 'u32[]', space=smem, size = 0x4, offset = 0x4, fixed_abs, tag = 'smem constant byte address 0x4 - core index']
  #allocation1 [shape = 'u32[72,128]{1,0:T(1,128)}', space=vmem, size = 0x9000, scoped, tag = 'internal scratch']
  %s0 = inlined_call_operand.vmem [shape: f32[8,256], index: 0, kind: input, shape index: {}]
  %s1 = inlined_call_operand.hbm [shape: f32[256,128], index: 1, kind: input, shape index: {}]
  %s2 = inlined_call_operand.vmem [shape: f32[1,128], index: 2, kind: input, shape index: {}]
  %s3 = inlined_call_operand.vmem [shape: f32[128,2], index: 3, kind: input, shape index: {}]
  %s4 = inlined_call_operand.vmem [shape: f32[1,2], index: 4, kind: input, shape index: {}]
  %s5 = inlined_call_operand.vmem [shape: f32[8,2], index: 5, kind: output, shape index: {}]
  %s6 = sld [smem:[#allocation0]]
  $region34: #{tpu_custom_call.1} parent=0
    _
  %s8 = ssub.s32 1, %s6
  %s9 = scalar_select 0, %s8, %s6
  $region1: #{tpu_custom_call.1} parent=0
    #allocation2 [shape = 'u8[131072]{0}', space=vmem, size = 0x20000, scoped, tag = 'input window, operand 1, single buffered']
    #allocation3 [shape = 's32[1]{0}', space=sflag, size = 0x4, scoped, tag = 'scoped memory for tpu_custom_call.1']
    %10 = vsyncpa [#allocation3], 0
    // Predicated region
    $region2: #{tpu_custom_call.1} parent=1 // pred_check
      _
    $region3: #{tpu_custom_call.1} parent=1 // pred_check_branch
      %12 = sbr.rel (0) target = $region5
    $region4: #{tpu_custom_call.1} parent=1 // pred_region
      _
    $region5: #{tpu_custom_call.1} parent=1 // pred_fallthru
      _
    // Predicated region
    $region6: #{tpu_custom_call.1} parent=1 // pred_check
      _
    $region7: #{tpu_custom_call.1} parent=1 // pred_check_branch
      %14 = sbr.rel (0) target = $region9
    $region8: #{tpu_custom_call.1} parent=1 // pred_region
      %16 = vsyncadd [#allocation3], 0
      %s17 = sshll.u32 %s1, 4
      %s18 = int_to_ptr.hbm [resolvable:$true] %s17
      %s19 = sshll.u32 [#allocation2], 4
      %s20 = int_to_ptr.vmem [resolvable:$true] %s19
      %25 = dma.hbm_to_vmem [thread:$0]  %s18, 4096, %s20, [#allocation3], 128, 128, 8
    $region9: #{tpu_custom_call.1} parent=1 // pred_fallthru
      _
    // Predicated region
    $region10: #{tpu_custom_call.1} parent=1 // pred_check
      _
    $region11: #{tpu_custom_call.1} parent=1 // pred_check_branch
      %27 = sbr.rel (0) target = $region13
    $region12: #{tpu_custom_call.1} parent=1 // pred_region
      _
    $region13: #{tpu_custom_call.1} parent=1 // pred_fallthru
      _
    // Predicated region
    $region14: #{tpu_custom_call.1} parent=1 // pred_check
      _
    $region15: #{tpu_custom_call.1} parent=1 // pred_check_branch
      %29 = sbr.rel (0) target = $region17
    $region16: #{tpu_custom_call.1} parent=1 // pred_region
      _
    $region17: #{tpu_custom_call.1} parent=1 // pred_fallthru
      _
    // Predicated region
    $region18: #{tpu_custom_call.1} parent=1 // pred_check
      _
    $region19: #{tpu_custom_call.1} parent=1 // pred_check_branch
      %31 = sbr.rel (0) target = $region21
    $region20: #{tpu_custom_call.1} parent=1 // pred_region
      _
    $region21: #{tpu_custom_call.1} parent=1 // pred_fallthru
      _
    // Predicated region
    $region22: #{tpu_custom_call.1} parent=1 // pred_check
      _
    $region23: #{tpu_custom_call.1} parent=1 // pred_check_branch
      %33 = sbr.rel (0) target = $region25
    $region24: #{tpu_custom_call.1} parent=1 // pred_region
      %35 = dma.done [#allocation3], 4096
    $region25: #{tpu_custom_call.1} parent=1 // pred_fallthru
      _
    %v36 = vld [vmem:[%s0] sm:$0xff]
    %v37 = vld [vmem:[%s0 + $0x8] sm:$0xff]
    %v38 = vld [vmem:[#allocation2] sm:$0xff]
    %v39 = vld [vmem:[#allocation2 + $0x8] sm:$0xff]
    %v40 = vld [vmem:[#allocation2 + $0x10] sm:$0xff]
    %v41 = vld [vmem:[#allocation2 + $0x18] sm:$0xff]
    %v42 = vld [vmem:[#allocation2 + $0x20] sm:$0xff]
    %v43 = vld [vmem:[#allocation2 + $0x28] sm:$0xff]
    %v44 = vld [vmem:[#allocation2 + $0x30] sm:$0xff]
    %v45 = vld [vmem:[#allocation2 + $0x38] sm:$0xff]
    %v46 = vld [vmem:[#allocation2 + $0x40] sm:$0xff]
    %v47 = vld [vmem:[#allocation2 + $0x48] sm:$0xff]
    %v48 = vld [vmem:[#allocation2 + $0x50] sm:$0xff]
    %v49 = vld [vmem:[#allocation2 + $0x58] sm:$0xff]
    %v50 = vld [vmem:[#allocation2 + $0x60] sm:$0xff]
    %v51 = vld [vmem:[#allocation2 + $0x68] sm:$0xff]
    %v52 = vld [vmem:[#allocation2 + $0x70] sm:$0xff]
    %v53 = vld [vmem:[#allocation2 + $0x78] sm:$0xff]
    %v54 = vld [vmem:[#allocation2 + $0x80] sm:$0xff]
    %v55 = vld [vmem:[#allocation2 + $0x88] sm:$0xff]
    %v56 = vld [vmem:[#allocation2 + $0x90] sm:$0xff]
    %v57 = vld [vmem:[#allocation2 + $0x98] sm:$0xff]
    %v58 = vld [vmem:[#allocation2 + $0xa0] sm:$0xff]
    %v59 = vld [vmem:[#allocation2 + $0xa8] sm:$0xff]
    %v60 = vld [vmem:[#allocation2 + $0xb0] sm:$0xff]
    %v61 = vld [vmem:[#allocation2 + $0xb8] sm:$0xff]
    %v62 = vld [vmem:[#allocation2 + $0xc0] sm:$0xff]
    %v63 = vld [vmem:[#allocation2 + $0xc8] sm:$0xff]
    %v64 = vld [vmem:[#allocation2 + $0xd0] sm:$0xff]
    %v65 = vld [vmem:[#allocation2 + $0xd8] sm:$0xff]
    %v66 = vld [vmem:[#allocation2 + $0xe0] sm:$0xff]
    %v67 = vld [vmem:[#allocation2 + $0xe8] sm:$0xff]
    %v68 = vld [vmem:[#allocation2 + $0xf0] sm:$0xff]
    %v69 = vld [vmem:[#allocation2 + $0xf8] sm:$0xff]
    %v70 = vld [vmem:[%s2] sm:$0x1]
    %v72 = vperm.slane %v70, 0
    %74 = vmatpush.msra.mxu0 %v53
    %75 = vmatpush.msra.mxu0 %v52
    %76 = vmatpush.msra.mxu0 %v51
    %77 = vmatpush.msra.mxu0 %v50
    %78 = vmatpush.msra.mxu0 %v49
    %79 = vmatpush.msra.mxu0 %v48
    %80 = vmatpush.msra.mxu0 %v47
    %81 = vmatpush.msra.mxu0 %v46
    %82 = vmatpush.msra.mxu0 %v45
    %83 = vmatpush.msra.mxu0 %v44
    %84 = vmatpush.msra.mxu0 %v43
    %85 = vmatpush.msra.mxu0 %v42
    %86 = vmatpush.msra.mxu0 %v41
    %87 = vmatpush.msra.mxu0 %v40
    %88 = vmatpush.msra.mxu0 %v39
    %89 = vmatpush.msra.mxu0 %v38
    %90 = vmatmul.f32.gmra.mxu0 %v36
    %v91 = vpop.f32.mrf.mxu0
    %v92 = vadd.f32 %v72, %v91
    %93 = vdwg.mxu0
    %94 = vmatpush.msra.mxu0 %v69
    %95 = vmatpush.msra.mxu0 %v68
    %96 = vmatpush.msra.mxu0 %v67
    %97 = vmatpush.msra.mxu0 %v66
    %98 = vmatpush.msra.mxu0 %v65
    %99 = vmatpush.msra.mxu0 %v64
    %100 = vmatpush.msra.mxu0 %v63
    %101 = vmatpush.msra.mxu0 %v62
    %102 = vmatpush.msra.mxu0 %v61
    %103 = vmatpush.msra.mxu0 %v60
    %104 = vmatpush.msra.mxu0 %v59
    %105 = vmatpush.msra.mxu0 %v58
    %106 = vmatpush.msra.mxu0 %v57
    %107 = vmatpush.msra.mxu0 %v56
    %108 = vmatpush.msra.mxu0 %v55
    %109 = vmatpush.msra.mxu0 %v54
    %110 = vmatmul.f32.gmra.mxu0 %v37
    %v111 = vpop.f32.mrf.mxu0
    %v112 = vadd.f32 %v92, %v111
    %113 = vdwg.mxu0
    %v114 = vxor.u32 %v112, 2147483648
    %v115 = vmul.f32 %v114, 1.442695
    %v116 = vpow.pop %v115
    %v117 = vadd.f32 %v116, 1.0
    %v118 = vrcp.pop %v117
    %v119 = vmul.f32 %v117, %v118
    %v120 = vsub.f32 1.0, %v119
    %v121 = vmul.f32 %v118, %v120
    %v122 = vadd.f32 %v118, %v121
    %vm123 = vweird.f32 %v117
    %vm124 = vweird.f32 %v118
    %vm125 = vmor %vm123, %vm124
    %v126 = vsel %vm125, %v118, %v122
    %v127 = vand.u32 2147483647, %v117
    %vm128 = vcmp.eq.f32.partialorder %v127, 8.507059e+37
    %v129 = vand.u32 %v117, 2147483648
    %v130 = vor.u32 1.1754944e-38, %v129
    %v131 = vsel %vm128, %v130, %v126
    %v132 = vmul.f32 1.0, %v131
    %v133 = vld [vmem:[%s3] sm:$0xff]
    %v134 = vld [vmem:[%s3 + $0x8] sm:$0xff]
    %v135 = vld [vmem:[%s3 + $0x10] sm:$0xff]
    %v136 = vld [vmem:[%s3 + $0x18] sm:$0xff]
    %v137 = vld [vmem:[%s3 + $0x20] sm:$0xff]
    %v138 = vld [vmem:[%s3 + $0x28] sm:$0xff]
    %v139 = vld [vmem:[%s3 + $0x30] sm:$0xff]
    %v140 = vld [vmem:[%s3 + $0x38] sm:$0xff]
    %v141 = vld [vmem:[%s3 + $0x40] sm:$0xff]
    %v142 = vld [vmem:[%s3 + $0x48] sm:$0xff]
    %v143 = vld [vmem:[%s3 + $0x50] sm:$0xff]
    %v144 = vld [vmem:[%s3 + $0x58] sm:$0xff]
    %v145 = vld [vmem:[%s3 + $0x60] sm:$0xff]
    %v146 = vld [vmem:[%s3 + $0x68] sm:$0xff]
    %v147 = vld [vmem:[%s3 + $0x70] sm:$0xff]
    %v148 = vld [vmem:[%s3 + $0x78] sm:$0xff]
    %v149 = vld [vmem:[%s4] sm:$0x1]
    %v151 = vperm.slane %v149, 0
    %153 = vmatpush.msra.mxu0 %v148
    %154 = vmatpush.msra.mxu0 %v147
    %155 = vmatpush.msra.mxu0 %v146
    %156 = vmatpush.msra.mxu0 %v145
    %157 = vmatpush.msra.mxu0 %v144
    %158 = vmatpush.msra.mxu0 %v143
    %159 = vmatpush.msra.mxu0 %v142
    %160 = vmatpush.msra.mxu0 %v141
    %161 = vmatpush.msra.mxu0 %v140
    %162 = vmatpush.msra.mxu0 %v139
    %163 = vmatpush.msra.mxu0 %v138
    %164 = vmatpush.msra.mxu0 %v137
    %165 = vmatpush.msra.mxu0 %v136
    %166 = vmatpush.msra.mxu0 %v135
    %167 = vmatpush.msra.mxu0 %v134
    %168 = vmatpush.msra.mxu0 %v133
    %169 = vmatmul.f32.gmra.mxu0 %v132
    %v170 = vpop.f32.mrf.mxu0
    %v171 = vadd.f32 %v151, %v170
    %172 = vdwg.mxu0
    %vm173 = vcmask 15360
    %174 = vst.msk [vmem:[%s5] sm:$0xff] %vm173, %v171
    // Predicated region
    $region26: #{tpu_custom_call.1} parent=1 // pred_check
      _
    $region27: #{tpu_custom_call.1} parent=1 // pred_check_branch
      %176 = sbr.rel (0) target = $region29
    $region28: #{tpu_custom_call.1} parent=1 // pred_region
      _
    $region29: #{tpu_custom_call.1} parent=1 // pred_fallthru
      _
    // Predicated region
    $region30: #{tpu_custom_call.1} parent=1 // pred_check
      _
    $region31: #{tpu_custom_call.1} parent=1 // pred_check_branch
      %178 = sbr.rel (0) target = $region33
    $region32: #{tpu_custom_call.1} parent=1 // pred_region
      _
    $region33: #{tpu_custom_call.1} parent=1 // pred_fallthru
      _
    %179 = vsyncpa [#allocation3], 1

</llo_original>
